<compile_context>
chip_gen: v5e
topology: v5e:2x2
jax: 0.10.0
libtpu: 0.0.40
codegen_flags: <defaults>
</compile_context>

<pallas_src>
import functools
import math

import jax
import jax.numpy as jnp
from jax.experimental import pallas as pl
from jax.experimental.pallas import tpu as pltpu


# ----------------------------------------------------------------------------
# Parameter / operator construction (plain-JAX glue, deterministic).
# ----------------------------------------------------------------------------
def hadamard_matrix(n):
    assert n & (n - 1) == 0 and n > 0
    H = jnp.array([[1.0]], dtype=jnp.float32)
    while H.shape[0] < n:
        H = jnp.block([[H, H], [H, -H]])
    return H


def build_dcnet_params(h, w, M, key, alpha=1.0):
    N = h * w
    # HadamSplit-like operator: F = kron(Hh, Hw) = flattened 2-D Hadamard patterns.
    # Ord = ones -> identity permutation, so DCNet.__init__'s sigma reindexing is a no-op.
    F = jnp.kron(hadamard_matrix(h), hadamard_matrix(w)).astype(jnp.float32)   # (N, N)
    Hm = F[:M]                                                                 # (M, N)
    P_pos = jnp.maximum(Hm, 0.0)
    P_neg = jnp.maximum(-Hm, 0.0)
    # Torch interleaves +/- rows; kept only for the pure-JAX reference.
    P_inter = jnp.zeros((2 * M, N), jnp.float32).at[0::2].set(P_pos).at[1::2].set(P_neg)

    # Covariance prior (synthetic, deterministic, well conditioned).
    A = jax.random.uniform(key, (N, N), dtype=jnp.float32)
    sigma = A @ A.T / N + 0.1 * jnp.eye(N, dtype=jnp.float32)

    # TikhonovMeasurementPriorDiag.__init__
    var_prior = jnp.diag(sigma)[:M]
    denoi_w = jnp.sqrt(var_prior)                                              # (M,) std-dev prior
    Sigma1 = sigma[:M, :M]
    Sigma21 = sigma[M:, :M]
    Wcomp = jnp.linalg.solve(Sigma1.T, Sigma21.T).T                            # (N-M, M)

    # SplitPoisson normalization offset: m = 2*(y+ - y-)/alpha - H @ 1_N
    # TODO(synk): SplitPoisson's offset re-derived analytically (exact for
    # NoNoise / alpha=1) since spyrit's prep.py was not part of the given source.
    h_ones = Hm @ jnp.ones((N,), jnp.float32)                                  # (M,)

    # ---- Kernel-side folded operators (exact algebra) -----------------------
    #  Grec  = (F[:M] + Wcomp.T @ F[M:]) / N   : completion + HadamSplit.inverse
    #  Ht    = H.T (optionally * 1/alpha)      : single acquisition matmul
    #  m_off = (1/alpha - 1) * (H @ 1)         : SplitPoisson offset after folding (x+1)/2
    #  a_sq  = denoi_w^2                       : variance prior, pre-squared on host
    Grec = (F[:M, :] + Wcomp.T @ F[M:, :]) / N                                 # (M, N)

    inv_alpha = 1.0 / float(alpha)
    # Fold 1/alpha into Ht only when it stays exact in bf16 (+/- power-of-two entries).
    fold_alpha = (alpha > 0) and (math.frexp(float(alpha))[0] == 0.5)
    Ht = Hm.T * (inv_alpha if fold_alpha else 1.0)                             # (N, M)

    return dict(
        F=F, H=Hm, P_inter=P_inter, denoi_w=denoi_w, Wcomp=Wcomp, h_ones=h_ones,
        alpha=float(alpha), M=M, N=N, h=h, w=w, fold_alpha=fold_alpha,
        Ht_bf16=Ht.astype(jnp.bfloat16),               # +/-1 (or +/-2^-k): lossless in bf16
        Grec_bf16=Grec.astype(jnp.bfloat16),           # lossy quantization (validated below)
        m_off=((inv_alpha - 1.0) * h_ones).reshape(1, M).astype(jnp.float32),
        a_sq=(denoi_w ** 2).reshape(1, M).astype(jnp.float32),
    )


# ----------------------------------------------------------------------------
# Pallas kernel: acquisition + SplitPoisson + Tikhonov reconstruction, fused.
# Grid: (batch tiles, output-column tiles).  y1 is computed once per batch tile
# (at j == 0) into a VMEM scratch and reused for every Grec column tile.
# ----------------------------------------------------------------------------
def dcnet_recon_kernel(x_ref, ht_ref, moff_ref, a_ref, grec_ref, out_ref, y1_ref,
                       *, inv_alpha, fold_alpha, N):
    j = pl.program_id(1)

    @pl.when(j == 0)
    def _():
        x = x_ref[...]                                            # (TB, N) bf16, in [-1, 1]
        # Acquisition (NoNoise split Hadamard) + SplitPoisson, algebraically folded:
        #   m   = (x @ H.T)/alpha + (1/alpha - 1) * (H @ 1)
        #   var = 2*(sum(x) + N)/alpha^2
        xh = jnp.dot(x, ht_ref[...], preferred_element_type=jnp.float32)   # (TB, M) MXU
        if fold_alpha:
            m = xh + moff_ref[...]                                # 1/alpha already in Ht
        else:
            m = xh * inv_alpha + moff_ref[...]
        var = (2.0 * inv_alpha * inv_alpha) * (
            jnp.sum(x.astype(jnp.float32), axis=-1, keepdims=True) + N)    # (TB, 1)

        # Denoise_layer.tikho (x_0 == 0 so `m - H @ x_0` and the final `x_0 + ...` vanish).
        a = a_ref[...]                                            # (1, M) variance prior
        y1 = (a * pl.reciprocal(a + var, approx=True)) * m        # EUP reciprocal, VPU muls
        y1_ref[...] = y1.astype(y1_ref.dtype)

    # Completion + HadamSplit.inverse folded into one (M, N) matrix, column-tiled.
    out_ref[...] = jnp.dot(y1_ref[...], grec_ref[...],
                           preferred_element_type=jnp.float32).astype(out_ref.dtype)


# ----------------------------------------------------------------------------
# Tiling / VMEM helpers.
# ----------------------------------------------------------------------------
def _choose_batch_tiling(bc, prefer_steps=2):
    """MXU-friendly batch tile + padded batch size.

    Pads bc (to a multiple of 8 at least) instead of falling back to tiny tiles,
    bounds padding waste at ~2x, and prefers >= `prefer_steps` grid steps so both
    TensorCores on a v7x chip (or megacore) get work."""
    bc8 = -(-bc // 8) * 8
    fallback = None
    for tb in (512, 256, 128, 64, 32, 16, 8):
        padded = -(-bc8 // tb) * tb
        if padded - bc > max(bc, 8):          # too much padding waste
            continue
        if padded // tb >= prefer_steps:
            return tb, padded
        if fallback is None:
            fallback = (tb, padded)
    return fallback if fallback is not None else (8, bc8)


def _vmem_need_bytes(N, M, tb, tn, nc):
    ht = N * M * 2                            # bf16 H.T, single-buffered (constant index)
    grec = (1 if nc == 1 else 2) * M * tn * 2  # bf16 Grec tile (double-buffered if streamed)
    xin = 2 * tb * N * 2                      # bf16 x tile, double-buffered
    out = 2 * tb * tn * 4                     # f32 out tile, double-buffered
    y1 = tb * M * 2                           # bf16 y1 scratch
    small = 4 * (2 * M * 4) + (1 << 20)       # moff + a_sq + slack
    return ht + grec + xin + out + y1 + small


def _choose_col_tile(N, M, tb, budget_bytes):
    # Column-tile Grec only when the full (M, N) operand would blow the VMEM budget
    # (v7x at production N).  Keep tn a multiple of 128 that divides N.
    tn = N
    while tn % 256 == 0 and _vmem_need_bytes(N, M, tb, tn, N // tn) > budget_bytes:
        tn //= 2
    # TODO(synk): if even tn == 128 does not fit the budget, also shrink tb here.
    return tn


def _vmem_budget_bytes():
    try:
        cap = int(pltpu.get_tpu_info().vmem_capacity_bytes)   # 128 MiB v5e/v6e, 64 MiB v7x
    except Exception:
        cap = 64 << 20                                        # conservative (v7x) fallback
    return max(cap - (16 << 20), 24 << 20)                    # leave compiler headroom


# ----------------------------------------------------------------------------
# Wrapper.
# ----------------------------------------------------------------------------
def dcnet_forward(x, params, *, out_dtype=jnp.float32):
    B, C, h, w = x.shape
    M, N, alpha = params["M"], params["N"], params["alpha"]
    assert (h, w) == (params["h"], params["w"])
    bc = B * C

    tb, bc_pad = _choose_batch_tiling(bc)
    budget = _vmem_budget_bytes()
    tn = _choose_col_tile(N, M, tb, budget)
    nc = N // tn
    vmem_limit = int(min(max(_vmem_need_bytes(N, M, tb, tn, nc) + (4 << 20), 32 << 20),
                         budget))

    # Stream x in bf16 (halves input HBM traffic; mem-bound regime on v5e/v6e).
    xf = x.reshape(bc, N).astype(jnp.bfloat16)
    if bc_pad != bc:
        xf = jnp.pad(xf, ((0, bc_pad - bc), (0, 0)))

    Ht = params["Ht_bf16"]        # (N, M)  bf16
    Grec = params["Grec_bf16"]    # (M, N)  bf16
    moff = params["m_off"]        # (1, M)  f32
    a_sq = params["a_sq"]         # (1, M)  f32

    kernel = functools.partial(dcnet_recon_kernel,
                               inv_alpha=1.0 / alpha,
                               fold_alpha=params["fold_alpha"],
                               N=float(N))

    def _call(single_buffer_weights):
        def wspec(shape, index_map, allow_single):
            if single_buffer_weights and allow_single:
                return pl.BlockSpec(shape, index_map, pipeline_mode=pl.Buffered(1))
            return pl.BlockSpec(shape, index_map)

        in_specs = [
            pl.BlockSpec((tb, N), lambda i, j: (i, 0)),            # x tile (bf16, batch-parallel)
            wspec((N, M), lambda i, j: (0, 0), True),              # H.T   (bf16, resident)
            wspec((1, M), lambda i, j: (0, 0), True),              # SplitPoisson offset
            wspec((1, M), lambda i, j: (0, 0), True),              # variance prior (w^2)
            wspec((M, tn), lambda i, j: (0, j), nc == 1),          # Grec (resident iff nc==1)
        ]
        return pl.pallas_call(
            kernel,
            out_shape=jax.ShapeDtypeStruct((bc_pad, N), out_dtype),
            grid_spec=pltpu.PrefetchScalarGridSpec(
                num_scalar_prefetch=0,
                grid=(bc_pad // tb, nc),
                in_specs=in_specs,
                out_specs=pl.BlockSpec((tb, tn), lambda i, j: (i, j)),
                scratch_shapes=[pltpu.VMEM((tb, M), jnp.bfloat16)],   # y1 carry across j
            ),
            compiler_params=pltpu.CompilerParams(
                dimension_semantics=("parallel", "arbitrary"),
                vmem_limit_bytes=vmem_limit,
            ),
        )(xf, Ht, moff, a_sq, Grec)

    out = None
    for single_buf in (True, False):
        try:
            out = _call(single_buf)
            break
        except Exception:
            # Fallback: default (double-buffered) weight blocks if Buffered(1) is rejected.
            if not single_buf:
                raise
    out = out[:bc]
    return out.reshape(B, C, h, w)


# ----------------------------------------------------------------------------
# Pure-JAX reference mirroring the PyTorch semantics (interleaved P, even/odd).
# ----------------------------------------------------------------------------
def dcnet_reference(x, params):
    B, C, h, w = x.shape
    M, N, alpha = params["M"], params["N"], params["alpha"]
    bc = B * C
    xf = x.reshape(bc, N).astype(jnp.float32)
    y = ((xf + 1.0) / 2.0) @ params["P_inter"].T                     # (bc, 2M)
    ye, yo = y[:, 0::2], y[:, 1::2]
    var = 4.0 * (ye + yo) / (alpha * alpha)
    m = 2.0 * (ye - yo) / alpha - params["h_ones"]
    x0 = jnp.zeros((bc, N), jnp.float32)
    m = m - x0 @ params["H"].T
    a = params["denoi_w"] ** 2
    y1 = (a / (a + var)) * m
    y2 = y1 @ params["Wcomp"].T
    yfull = jnp.concatenate([y1, y2], axis=-1)
    out = x0 + yfull @ params["F"] / N
    return out.reshape(B, C, h, w)


if __name__ == "__main__":
    B, C, h, w = 2, 4, 16, 16          # N = 256, BC = 8
    M = 128                            # number of kept measurements
    key = jax.random.PRNGKey(0)
    k_par, k_x = jax.random.split(key)

    params = build_dcnet_params(h, w, M, k_par, alpha=1.0)
    x = jax.random.uniform(k_x, (B, C, h, w), jnp.float32, minval=-1.0, maxval=1.0)

    out = jax.block_until_ready(dcnet_forward(x, params))
    ref = jax.block_until_ready(dcnet_reference(x, params))

    assert out.shape == (B, C, h, w)
    err = float(jnp.max(jnp.abs(out - ref)) / (jnp.max(jnp.abs(ref)) + 1e-6))
    assert err < 1e-2, f"kernel vs reference mismatch: rel err {err}"
    print("KERNEL_OK")
</pallas_src>

<mosaic_0001>
module attributes {stable_mosaic.version = 11 : i64} {
  func.func @dcnet_recon_kernel(%arg0: i32, %arg1: i32, %arg2: memref<16x256xbf16, #tpu.memory_space<vmem>>, %arg3: memref<256x128xbf16, #tpu.memory_space<vmem>>, %arg4: memref<1x128xf32, #tpu.memory_space<vmem>>, %arg5: memref<1x128xf32, #tpu.memory_space<vmem>>, %arg6: memref<128x256xbf16, #tpu.memory_space<vmem>>, %arg7: memref<16x256xf32, #tpu.memory_space<vmem>>, %arg8: memref<16x128xbf16, #tpu.memory_space<vmem>>) attributes {dimension_semantics = [#tpu.dimension_semantics<parallel>, #tpu.dimension_semantics<arbitrary>], iteration_bounds = array<i64: 1, 1>, scalar_prefetch = 0 : i64, scratch_operands = 1 : i64, tpu.core_type = #tpu.core_type<tc>, window_params = [{transform_indices = @transform_0, window_bounds = array<i64: 16, 256>}, {pipeline_mode = #tpu.pipeline_mode<synchronous>, transform_indices = @transform_1, window_bounds = array<i64: 256, 128>}, {pipeline_mode = #tpu.pipeline_mode<synchronous>, transform_indices = @transform_2, window_bounds = array<i64: 1, 128>}, {pipeline_mode = #tpu.pipeline_mode<synchronous>, transform_indices = @transform_3, window_bounds = array<i64: 1, 128>}, {pipeline_mode = #tpu.pipeline_mode<synchronous>, transform_indices = @transform_4, window_bounds = array<i64: 128, 256>}, {transform_indices = @transform_5, window_bounds = array<i64: 16, 256>}]} {
    %c0_i32 = arith.constant 0 : i32
    %0 = arith.cmpi eq, %arg1, %c0_i32 : i32
    %1 = arith.extui %0 : i1 to i32
    %c0_i32_0 = arith.constant 0 : i32
    %2 = arith.cmpi ne, %1, %c0_i32_0 : i32
    scf.if %2 {
      %c0_6 = arith.constant 0 : index
      %c0_7 = arith.constant 0 : index
      %7 = vector.load %arg2[%c0_6, %c0_7] : memref<16x256xbf16, #tpu.memory_space<vmem>>, vector<16x256xbf16>
      %c0_8 = arith.constant 0 : index
      %c0_9 = arith.constant 0 : index
      %8 = vector.load %arg3[%c0_8, %c0_9] : memref<256x128xbf16, #tpu.memory_space<vmem>>, vector<256x128xbf16>
      %cst_10 = arith.constant dense<0.000000e+00> : vector<16x128xf32>
      %9 = tpu.matmul %7, %8, %cst_10 {dimension_numbers = #tpu.dot_dimension_numbers<[1], [0], [0], [1], [0, 0, 1, 1], [], []>} : vector<16x256xbf16>, vector<256x128xbf16>, vector<16x128xf32> -> vector<16x128xf32>
      %c0_11 = arith.constant 0 : index
      %c0_12 = arith.constant 0 : index
      %10 = vector.load %arg4[%c0_11, %c0_12] : memref<1x128xf32, #tpu.memory_space<vmem>>, vector<1x128xf32>
      %11 = vector.broadcast %10 : vector<1x128xf32> to vector<16x128xf32>
      %12 = arith.addf %9, %11 : vector<16x128xf32>
      %13 = arith.extf %7 : vector<16x256xbf16> to vector<16x256xf32>
      %cst_13 = arith.constant dense<0.000000e+00> : vector<16xf32>
      %14 = vector.multi_reduction <add>, %13, %cst_13 [1] : vector<16x256xf32> to vector<16xf32>
      %15 = vector.shape_cast %14 : vector<16xf32> to vector<16x1xf32>
      %cst_14 = arith.constant 2.560000e+02 : f32
      %16 = vector.broadcast %cst_14 : f32 to vector<16x1xf32>
      %17 = arith.addf %15, %16 : vector<16x1xf32>
      %cst_15 = arith.constant 2.000000e+00 : f32
      %18 = vector.broadcast %cst_15 : f32 to vector<16x1xf32>
      %19 = arith.mulf %18, %17 : vector<16x1xf32>
      %c0_16 = arith.constant 0 : index
      %c0_17 = arith.constant 0 : index
      %20 = vector.load %arg5[%c0_16, %c0_17] : memref<1x128xf32, #tpu.memory_space<vmem>>, vector<1x128xf32>
      %21 = vector.broadcast %20 : vector<1x128xf32> to vector<16x128xf32>
      %22 = vector.broadcast %19 : vector<16x1xf32> to vector<16x128xf32>
      %23 = arith.addf %21, %22 : vector<16x128xf32>
      %24 = tpu.reciprocal %23 {approx = true} : vector<16x128xf32> -> vector<16x128xf32>
      %25 = vector.broadcast %20 : vector<1x128xf32> to vector<16x128xf32>
      %26 = arith.mulf %25, %24 : vector<16x128xf32>
      %27 = arith.mulf %26, %12 : vector<16x128xf32>
      %28 = arith.truncf %27 : vector<16x128xf32> to vector<16x128xbf16>
      %c0_18 = arith.constant 0 : index
      %c0_19 = arith.constant 0 : index
      %29 = vector.load %arg8[%c0_18, %c0_19] : memref<16x128xbf16, #tpu.memory_space<vmem>>, vector<16x128xbf16>
      tpu.vector_store %arg8[%c0_18, %c0_19], %28 {strides = array<i32>} : memref<16x128xbf16, #tpu.memory_space<vmem>>, vector<16x128xbf16>,
    } else {
    }
    %c0 = arith.constant 0 : index
    %c0_1 = arith.constant 0 : index
    %3 = vector.load %arg8[%c0, %c0_1] : memref<16x128xbf16, #tpu.memory_space<vmem>>, vector<16x128xbf16>
    %c0_2 = arith.constant 0 : index
    %c0_3 = arith.constant 0 : index
    %4 = vector.load %arg6[%c0_2, %c0_3] : memref<128x256xbf16, #tpu.memory_space<vmem>>, vector<128x256xbf16>
    %cst = arith.constant dense<0.000000e+00> : vector<16x256xf32>
    %5 = tpu.matmul %3, %4, %cst {dimension_numbers = #tpu.dot_dimension_numbers<[1], [0], [0], [1], [0, 0, 1, 1], [], []>} : vector<16x128xbf16>, vector<128x256xbf16>, vector<16x256xf32> -> vector<16x256xf32>
    %c0_4 = arith.constant 0 : index
    %c0_5 = arith.constant 0 : index
    %6 = vector.load %arg7[%c0_4, %c0_5] : memref<16x256xf32, #tpu.memory_space<vmem>>, vector<16x256xf32>
    tpu.vector_store %arg7[%c0_4, %c0_5], %5 {strides = array<i32>} : memref<16x256xf32, #tpu.memory_space<vmem>>, vector<16x256xf32>,
    return
  }
  func.func @transform_0(%arg0: i32, %arg1: i32) -> (i32, i32) {
    %c0_i32 = arith.constant 0 : i32
    %c0_i32_0 = arith.constant 0 : i32
    return %arg0, %c0_i32 : i32, i32
  }
  func.func @transform_1(%arg0: i32, %arg1: i32) -> (i32, i32) {
    %c0_i32 = arith.constant 0 : i32
    %c0_i32_0 = arith.constant 0 : i32
    %c0_i32_1 = arith.constant 0 : i32
    return %c0_i32, %c0_i32_0 : i32, i32
  }
  func.func @transform_2(%arg0: i32, %arg1: i32) -> (i32, i32) {
    %c0_i32 = arith.constant 0 : i32
    %c0_i32_0 = arith.constant 0 : i32
    %c0_i32_1 = arith.constant 0 : i32
    return %c0_i32, %c0_i32_0 : i32, i32
  }
  func.func @transform_3(%arg0: i32, %arg1: i32) -> (i32, i32) {
    %c0_i32 = arith.constant 0 : i32
    %c0_i32_0 = arith.constant 0 : i32
    %c0_i32_1 = arith.constant 0 : i32
    return %c0_i32, %c0_i32_0 : i32, i32
  }
  func.func @transform_4(%arg0: i32, %arg1: i32) -> (i32, i32) {
    %c0_i32 = arith.constant 0 : i32
    %c0_i32_0 = arith.constant 0 : i32
    return %c0_i32, %arg1 : i32, i32
  }
  func.func @transform_5(%arg0: i32, %arg1: i32) -> (i32, i32) {
    %c0_i32 = arith.constant 0 : i32
    return %arg0, %arg1 : i32, i32
  }
}

module attributes {stable_mosaic.version = 11 : i64} {
  func.func @dcnet_recon_kernel(%arg0: i32, %arg1: i32, %arg2: memref<16x256xbf16, #tpu.memory_space<vmem>>, %arg3: memref<256x128xbf16, #tpu.memory_space<vmem>>, %arg4: memref<1x128xf32, #tpu.memory_space<vmem>>, %arg5: memref<1x128xf32, #tpu.memory_space<vmem>>, %arg6: memref<128x256xbf16, #tpu.memory_space<vmem>>, %arg7: memref<16x256xf32, #tpu.memory_space<vmem>>, %arg8: memref<16x128xbf16, #tpu.memory_space<vmem>>) attributes {dimension_semantics = [#tpu.dimension_semantics<parallel>, #tpu.dimension_semantics<arbitrary>], iteration_bounds = array<i64: 1, 1>, scalar_prefetch = 0 : i64, scratch_operands = 1 : i64, tpu.core_type = #tpu.core_type<tc>, window_params = [{transform_indices = @transform_0, window_bounds = array<i64: 16, 256>}, {pipeline_mode = #tpu.pipeline_mode<synchronous>, transform_indices = @transform_1, window_bounds = array<i64: 256, 128>}, {pipeline_mode = #tpu.pipeline_mode<synchronous>, transform_indices = @transform_2, window_bounds = array<i64: 1, 128>}, {pipeline_mode = #tpu.pipeline_mode<synchronous>, transform_indices = @transform_3, window_bounds = array<i64: 1, 128>}, {transform_indices = @transform_4, window_bounds = array<i64: 128, 256>}, {transform_indices = @transform_5, window_bounds = array<i64: 16, 256>}]} {
    %c0_i32 = arith.constant 0 : i32
    %0 = arith.cmpi eq, %arg1, %c0_i32 : i32
    %1 = arith.extui %0 : i1 to i32
    %c0_i32_0 = arith.constant 0 : i32
    %2 = arith.cmpi ne, %1, %c0_i32_0 : i32
    scf.if %2 {
      %c0_6 = arith.constant 0 : index
      %c0_7 = arith.constant 0 : index
      %7 = vector.load %arg2[%c0_6, %c0_7] : memref<16x256xbf16, #tpu.memory_space<vmem>>, vector<16x256xbf16>
      %c0_8 = arith.constant 0 : index
      %c0_9 = arith.constant 0 : index
      %8 = vector.load %arg3[%c0_8, %c0_9] : memref<256x128xbf16, #tpu.memory_space<vmem>>, vector<256x128xbf16>
      %cst_10 = arith.constant dense<0.000000e+00> : vector<16x128xf32>
      %9 = tpu.matmul %7, %8, %cst_10 {dimension_numbers = #tpu.dot_dimension_numbers<[1], [0], [0], [1], [0, 0, 1, 1], [], []>} : vector<16x256xbf16>, vector<256x128xbf16>, vector<16x128xf32> -> vector<16x128xf32>
      %c0_11 = arith.constant 0 : index
      %c0_12 = arith.constant 0 : index
      %10 = vector.load %arg4[%c0_11, %c0_12] : memref<1x128xf32, #tpu.memory_space<vmem>>, vector<1x128xf32>
      %11 = vector.broadcast %10 : vector<1x128xf32> to vector<16x128xf32>
      %12 = arith.addf %9, %11 : vector<16x128xf32>
      %13 = arith.extf %7 : vector<16x256xbf16> to vector<16x256xf32>
      %cst_13 = arith.constant dense<0.000000e+00> : vector<16xf32>
      %14 = vector.multi_reduction <add>, %13, %cst_13 [1] : vector<16x256xf32> to vector<16xf32>
      %15 = vector.shape_cast %14 : vector<16xf32> to vector<16x1xf32>
      %cst_14 = arith.constant 2.560000e+02 : f32
      %16 = vector.broadcast %cst_14 : f32 to vector<16x1xf32>
      %17 = arith.addf %15, %16 : vector<16x1xf32>
      %cst_15 = arith.constant 2.000000e+00 : f32
      %18 = vector.broadcast %cst_15 : f32 to vector<16x1xf32>
      %19 = arith.mulf %18, %17 : vector<16x1xf32>
      %c0_16 = arith.constant 0 : index
      %c0_17 = arith.constant 0 : index
      %20 = vector.load %arg5[%c0_16, %c0_17] : memref<1x128xf32, #tpu.memory_space<vmem>>, vector<1x128xf32>
      %21 = vector.broadcast %20 : vector<1x128xf32> to vector<16x128xf32>
      %22 = vector.broadcast %19 : vector<16x1xf32> to vector<16x128xf32>
      %23 = arith.addf %21, %22 : vector<16x128xf32>
      %24 = tpu.reciprocal %23 {approx = true} : vector<16x128xf32> -> vector<16x128xf32>
      %25 = vector.broadcast %20 : vector<1x128xf32> to vector<16x128xf32>
      %26 = arith.mulf %25, %24 : vector<16x128xf32>
      %27 = arith.mulf %26, %12 : vector<16x128xf32>
      %28 = arith.truncf %27 : vector<16x128xf32> to vector<16x128xbf16>
      %c0_18 = arith.constant 0 : index
      %c0_19 = arith.constant 0 : index
      %29 = vector.load %arg8[%c0_18, %c0_19] : memref<16x128xbf16, #tpu.memory_space<vmem>>, vector<16x128xbf16>
      tpu.vector_store %arg8[%c0_18, %c0_19], %28 {strides = array<i32>} : memref<16x128xbf16, #tpu.memory_space<vmem>>, vector<16x128xbf16>,
    } else {
    }
    %c0 = arith.constant 0 : index
    %c0_1 = arith.constant 0 : index
    %3 = vector.load %arg8[%c0, %c0_1] : memref<16x128xbf16, #tpu.memory_space<vmem>>, vector<16x128xbf16>
    %c0_2 = arith.constant 0 : index
    %c0_3 = arith.constant 0 : index
    %4 = vector.load %arg6[%c0_2, %c0_3] : memref<128x256xbf16, #tpu.memory_space<vmem>>, vector<128x256xbf16>
    %cst = arith.constant dense<0.000000e+00> : vector<16x256xf32>
    %5 = tpu.matmul %3, %4, %cst {dimension_numbers = #tpu.dot_dimension_numbers<[1], [0], [0], [1], [0, 0, 1, 1], [], []>} : vector<16x128xbf16>, vector<128x256xbf16>, vector<16x256xf32> -> vector<16x256xf32>
    %c0_4 = arith.constant 0 : index
    %c0_5 = arith.constant 0 : index
    %6 = vector.load %arg7[%c0_4, %c0_5] : memref<16x256xf32, #tpu.memory_space<vmem>>, vector<16x256xf32>
    tpu.vector_store %arg7[%c0_4, %c0_5], %5 {strides = array<i32>} : memref<16x256xf32, #tpu.memory_space<vmem>>, vector<16x256xf32>,
    return
  }
  func.func @transform_0(%arg0: i32, %arg1: i32) -> (i32, i32) {
    %c0_i32 = arith.constant 0 : i32
    %c0_i32_0 = arith.constant 0 : i32
    return %arg0, %c0_i32 : i32, i32
  }
  func.func @transform_1(%arg0: i32, %arg1: i32) -> (i32, i32) {
    %c0_i32 = arith.constant 0 : i32
    %c0_i32_0 = arith.constant 0 : i32
    %c0_i32_1 = arith.constant 0 : i32
    return %c0_i32, %c0_i32_0 : i32, i32
  }
  func.func @transform_2(%arg0: i32, %arg1: i32) -> (i32, i32) {
    %c0_i32 = arith.constant 0 : i32
    %c0_i32_0 = arith.constant 0 : i32
    %c0_i32_1 = arith.constant 0 : i32
    return %c0_i32, %c0_i32_0 : i32, i32
  }
  func.func @transform_3(%arg0: i32, %arg1: i32) -> (i32, i32) {
    %c0_i32 = arith.constant 0 : i32
    %c0_i32_0 = arith.constant 0 : i32
    %c0_i32_1 = arith.constant 0 : i32
    return %c0_i32, %c0_i32_0 : i32, i32
  }
  func.func @transform_4(%arg0: i32, %arg1: i32) -> (i32, i32) {
    %c0_i32 = arith.constant 0 : i32
    %c0_i32_0 = arith.constant 0 : i32
    return %c0_i32, %arg1 : i32, i32
  }
  func.func @transform_5(%arg0: i32, %arg1: i32) -> (i32, i32) {
    %c0_i32 = arith.constant 0 : i32
    return %arg0, %arg1 : i32, i32
  }
}

</mosaic_0001>

<llo_original>
// kernel: tpu_custom_call.1
$region0: #{tpu_custom_call.1}
  #allocation0 [shape = 'u32[]', space=smem, size = 0x4, offset = 0x4, fixed_abs, tag = 'smem constant byte address 0x4 - core index']
  #allocation1 [shape = 'u32[72,128]{1,0:T(1,128)}', space=vmem, size = 0x9000, scoped, tag = 'internal scratch']
  #allocation2 [shape = 'bf16[16,128]{1,0:T(8,128)(2,1)}', space=vmem, size = 0x1000, scoped, tag = 'scratch operand']
  %s0 = inlined_call_operand.hbm [shape: bf16[16,256], index: 0, kind: input, shape index: {}]
  %s1 = inlined_call_operand.hbm [shape: bf16[256,128], index: 1, kind: input, shape index: {}]
  %s2 = inlined_call_operand.vmem [shape: f32[1,128], index: 2, kind: input, shape index: {}]
  %s3 = inlined_call_operand.vmem [shape: f32[1,128], index: 3, kind: input, shape index: {}]
  %s4 = inlined_call_operand.hbm [shape: bf16[128,256], index: 4, kind: input, shape index: {}]
  %s5 = inlined_call_operand.hbm [shape: f32[16,256], index: 5, kind: output, shape index: {}]
  %s6 = sld [smem:[#allocation0]]
  $region46: #{tpu_custom_call.1} parent=0
    _
  %s8 = ssub.s32 1, %s6
  %s9 = scalar_select 0, %s8, %s6
  $region1: #{tpu_custom_call.1} parent=0
    #allocation3 [shape = 'u8[8192]{0}', space=vmem, size = 0x2000, scoped, tag = 'input window, operand 0, single buffered']
    #allocation4 [shape = 's32[1]{0}', space=sflag, size = 0x4, scoped, tag = 'scoped memory for tpu_custom_call.1']
    #allocation5 [shape = 's32[1]{0}', space=sflag, size = 0x4, scoped, tag = 'scoped memory for tpu_custom_call.1']
    #allocation6 [shape = 'u8[65536]{0}', space=vmem, size = 0x10000, scoped, tag = 'input window, operand 1, single buffered']
    #allocation7 [shape = 's32[1]{0}', space=sflag, size = 0x4, scoped, tag = 'scoped memory for tpu_custom_call.1']
    #allocation8 [shape = 'u8[65536]{0}', space=vmem, size = 0x10000, scoped, tag = 'input window, operand 4, single buffered']
    #allocation9 [shape = 'u8[16384]{0}', space=vmem, size = 0x4000, scoped, tag = 'output window, operand 0, single buffered']
    %10 = vsyncpa [#allocation4], 0
    %11 = vsyncpa [#allocation7], 0
    %12 = vsyncpa [#allocation5], 0
    // Predicated region
    $region2: #{tpu_custom_call.1} parent=1 // pred_check
      _
    $region3: #{tpu_custom_call.1} parent=1 // pred_check_branch
      %14 = sbr.rel (0) target = $region5
    $region4: #{tpu_custom_call.1} parent=1 // pred_region
      %16 = vsyncadd [#allocation4], 0
      %s17 = sshll.u32 %s0, 4
      %s18 = int_to_ptr.hbm [resolvable:$true] %s17
      %s19 = sshll.u32 [#allocation3], 4
      %s20 = int_to_ptr.vmem [resolvable:$true] %s19
      %25 = dma.hbm_to_vmem [thread:$0]  %s18, 256, %s20, [#allocation4], 128, 128, 8
    $region5: #{tpu_custom_call.1} parent=1 // pred_fallthru
      _
    // Predicated region
    $region6: #{tpu_custom_call.1} parent=1 // pred_check
      _
    $region7: #{tpu_custom_call.1} parent=1 // pred_check_branch
      %27 = sbr.rel (0) target = $region9
    $region8: #{tpu_custom_call.1} parent=1 // pred_region
      %29 = vsyncadd [#allocation7], 0
      %s30 = sshll.u32 %s1, 4
      %s31 = int_to_ptr.hbm [resolvable:$true] %s30
      %s32 = sshll.u32 [#allocation6], 4
      %s33 = int_to_ptr.vmem [resolvable:$true] %s32
      %38 = dma.hbm_to_vmem [thread:$0]  %s31, 2048, %s33, [#allocation7], 64, 64, 4
    $region9: #{tpu_custom_call.1} parent=1 // pred_fallthru
      _
    // Predicated region
    $region10: #{tpu_custom_call.1} parent=1 // pred_check
      _
    $region11: #{tpu_custom_call.1} parent=1 // pred_check_branch
      %40 = sbr.rel (0) target = $region13
    $region12: #{tpu_custom_call.1} parent=1 // pred_region
      _
    $region13: #{tpu_custom_call.1} parent=1 // pred_fallthru
      _
    // Predicated region
    $region14: #{tpu_custom_call.1} parent=1 // pred_check
      _
    $region15: #{tpu_custom_call.1} parent=1 // pred_check_branch
      %42 = sbr.rel (0) target = $region17
    $region16: #{tpu_custom_call.1} parent=1 // pred_region
      _
    $region17: #{tpu_custom_call.1} parent=1 // pred_fallthru
      _
    // Predicated region
    $region18: #{tpu_custom_call.1} parent=1 // pred_check
      _
    $region19: #{tpu_custom_call.1} parent=1 // pred_check_branch
      %44 = sbr.rel (0) target = $region21
    $region20: #{tpu_custom_call.1} parent=1 // pred_region
      %46 = vsyncadd [#allocation7], 0
      %s47 = sshll.u32 %s4, 4
      %s48 = int_to_ptr.hbm [resolvable:$true] %s47
      %s49 = sshll.u32 [#allocation8], 4
      %s50 = int_to_ptr.vmem [resolvable:$true] %s49
      %55 = dma.hbm_to_vmem [thread:$0]  %s48, 2048, %s50, [#allocation7], 128, 128, 8
    $region21: #{tpu_custom_call.1} parent=1 // pred_fallthru
      _
    // Predicated region
    $region22: #{tpu_custom_call.1} parent=1 // pred_check
      _
    $region23: #{tpu_custom_call.1} parent=1 // pred_check_branch
      %57 = sbr.rel (0) target = $region25
    $region24: #{tpu_custom_call.1} parent=1 // pred_region
      %59 = dma.done [#allocation4], 256
    $region25: #{tpu_custom_call.1} parent=1 // pred_fallthru
      _
    // Predicated region
    $region26: #{tpu_custom_call.1} parent=1 // pred_check
      _
    $region27: #{tpu_custom_call.1} parent=1 // pred_check_branch
      %61 = sbr.rel (0) target = $region29
    $region28: #{tpu_custom_call.1} parent=1 // pred_region
      %63 = dma.done [#allocation7], 2048
    $region29: #{tpu_custom_call.1} parent=1 // pred_fallthru
      _
    // Predicated region
    $region30: #{tpu_custom_call.1} parent=1 // pred_check
      _
    $region31: #{tpu_custom_call.1} parent=1 // pred_check_branch
      %65 = sbr.rel (0) target = $region33
    $region32: #{tpu_custom_call.1} parent=1 // pred_region
      %67 = dma.done [#allocation7], 2048
    $region33: #{tpu_custom_call.1} parent=1 // pred_fallthru
      _
    %p68 = scmp.eq.s32.totalorder 0, 0
    // Predicated region
    $region34: #{tpu_custom_call.1} parent=1 // pred_check
      %p69 = pneg %p68
    $region35: #{tpu_custom_call.1} parent=1 // pred_check_branch
      %71 = sbr.rel (%p69) target = $region37
    $region36: #{tpu_custom_call.1} parent=1 // pred_region
      %v72 = vld [vmem:[#allocation3] sm:$0xff]
      %v73 = vld [vmem:[#allocation3 + $0x8] sm:$0xff]
      %v74 = vld [vmem:[#allocation6] sm:$0xf]
      %v75 = vld [vmem:[#allocation6 + $0x4] sm:$0xf]
      %v76 = vld [vmem:[#allocation6 + $0x8] sm:$0xf]
      %v77 = vld [vmem:[#allocation6 + $0xc] sm:$0xf]
      %v78 = vld [vmem:[#allocation6 + $0x10] sm:$0xf]
      %v79 = vld [vmem:[#allocation6 + $0x14] sm:$0xf]
      %v80 = vld [vmem:[#allocation6 + $0x18] sm:$0xf]
      %v81 = vld [vmem:[#allocation6 + $0x1c] sm:$0xf]
      %v82 = vld [vmem:[#allocation6 + $0x20] sm:$0xf]
      %v83 = vld [vmem:[#allocation6 + $0x24] sm:$0xf]
      %v84 = vld [vmem:[#allocation6 + $0x28] sm:$0xf]
      %v85 = vld [vmem:[#allocation6 + $0x2c] sm:$0xf]
      %v86 = vld [vmem:[#allocation6 + $0x30] sm:$0xf]
      %v87 = vld [vmem:[#allocation6 + $0x34] sm:$0xf]
      %v88 = vld [vmem:[#allocation6 + $0x38] sm:$0xf]
      %v89 = vld [vmem:[#allocation6 + $0x3c] sm:$0xf]
      %v90 = vld [vmem:[#allocation6 + $0x40] sm:$0xf]
      %v91 = vld [vmem:[#allocation6 + $0x44] sm:$0xf]
      %v92 = vld [vmem:[#allocation6 + $0x48] sm:$0xf]
      %v93 = vld [vmem:[#allocation6 + $0x4c] sm:$0xf]
      %v94 = vld [vmem:[#allocation6 + $0x50] sm:$0xf]
      %v95 = vld [vmem:[#allocation6 + $0x54] sm:$0xf]
      %v96 = vld [vmem:[#allocation6 + $0x58] sm:$0xf]
      %v97 = vld [vmem:[#allocation6 + $0x5c] sm:$0xf]
      %v98 = vld [vmem:[#allocation6 + $0x60] sm:$0xf]
      %v99 = vld [vmem:[#allocation6 + $0x64] sm:$0xf]
      %v100 = vld [vmem:[#allocation6 + $0x68] sm:$0xf]
      %v101 = vld [vmem:[#allocation6 + $0x6c] sm:$0xf]
      %v102 = vld [vmem:[#allocation6 + $0x70] sm:$0xf]
      %v103 = vld [vmem:[#allocation6 + $0x74] sm:$0xf]
      %v104 = vld [vmem:[#allocation6 + $0x78] sm:$0xf]
      %v105 = vld [vmem:[#allocation6 + $0x7c] sm:$0xf]
      %v106 = vld [vmem:[%s2] sm:$0x1]
      %v108 = vperm.slane %v106, 0
      %v112 = vunpack.c.l.b16 %v72
      %v113 = vunpack.c.h.b16 %v72
      %v114 = vunpack.c.l.b16 %v73
      %v115 = vunpack.c.h.b16 %v73
      %v116 = vpack.c.b16 %v114, %v112
      %v117 = vpack.c.b16 %v115, %v113
      %v152 = vunpack.c.l.b16 %v74
      %v153 = vunpack.c.l.b16 %v75
      %v154 = vunpack.c.l.b16 %v76
      %v155 = vunpack.c.l.b16 %v77
      %v156 = vunpack.c.l.b16 %v78
      %v157 = vunpack.c.l.b16 %v79
      %v158 = vunpack.c.l.b16 %v80
      %v159 = vunpack.c.l.b16 %v81
      %v160 = vunpack.c.l.b16 %v82
      %v161 = vunpack.c.l.b16 %v83
      %v162 = vunpack.c.l.b16 %v84
      %v163 = vunpack.c.l.b16 %v85
      %v164 = vunpack.c.l.b16 %v86
      %v165 = vunpack.c.l.b16 %v87
      %v166 = vunpack.c.l.b16 %v88
      %v167 = vunpack.c.l.b16 %v89
      %v168 = vunpack.c.l.b16 %v90
      %v169 = vunpack.c.l.b16 %v91
      %v170 = vunpack.c.l.b16 %v92
      %v171 = vunpack.c.l.b16 %v93
      %v172 = vunpack.c.l.b16 %v94
      %v173 = vunpack.c.l.b16 %v95
      %v174 = vunpack.c.l.b16 %v96
      %v175 = vunpack.c.l.b16 %v97
      %v176 = vunpack.c.l.b16 %v98
      %v177 = vunpack.c.l.b16 %v99
      %v178 = vunpack.c.l.b16 %v100
      %v179 = vunpack.c.l.b16 %v101
      %v180 = vunpack.c.l.b16 %v102
      %v181 = vunpack.c.l.b16 %v103
      %v182 = vunpack.c.l.b16 %v104
      %v183 = vunpack.c.l.b16 %v105
      %v184 = vpack.c.b16 %v153, %v152
      %v185 = vpack.c.b16 %v155, %v154
      %v186 = vpack.c.b16 %v157, %v156
      %v187 = vpack.c.b16 %v159, %v158
      %v188 = vpack.c.b16 %v161, %v160
      %v189 = vpack.c.b16 %v163, %v162
      %v190 = vpack.c.b16 %v165, %v164
      %v191 = vpack.c.b16 %v167, %v166
      %v192 = vpack.c.b16 %v169, %v168
      %v193 = vpack.c.b16 %v171, %v170
      %v194 = vpack.c.b16 %v173, %v172
      %v195 = vpack.c.b16 %v175, %v174
      %v196 = vpack.c.b16 %v177, %v176
      %v197 = vpack.c.b16 %v179, %v178
      %v198 = vpack.c.b16 %v181, %v180
      %v199 = vpack.c.b16 %v183, %v182
      %216 = vmatpush.bf16.msra.mxu0 %v191
      %217 = vmatpush.bf16.msra.mxu0 %v190
      %218 = vmatpush.bf16.msra.mxu0 %v189
      %219 = vmatpush.bf16.msra.mxu0 %v188
      %220 = vmatpush.bf16.msra.mxu0 %v187
      %221 = vmatpush.bf16.msra.mxu0 %v186
      %222 = vmatpush.bf16.msra.mxu0 %v185
      %223 = vmatpush.bf16.msra.mxu0 %v184
      %224 = vmatmul.bf16.gmra.mxu0 %v116
      %v225 = vpop.f32.mrf.mxu0
      %v226 = vadd.f32 %v108, %v225
      %v227 = vpop.f32.mrf.mxu0
      %v228 = vadd.f32 %v108, %v227
      %229 = vdwg.mxu0
      %230 = vmatpush.bf16.msra.mxu0 %v199
      %231 = vmatpush.bf16.msra.mxu0 %v198
      %232 = vmatpush.bf16.msra.mxu0 %v197
      %233 = vmatpush.bf16.msra.mxu0 %v196
      %234 = vmatpush.bf16.msra.mxu0 %v195
      %235 = vmatpush.bf16.msra.mxu0 %v194
      %236 = vmatpush.bf16.msra.mxu0 %v193
      %237 = vmatpush.bf16.msra.mxu0 %v192
      %238 = vmatmul.bf16.gmra.mxu0 %v117
      %v239 = vpop.f32.mrf.mxu0
      %v240 = vadd.f32 %v226, %v239
      %v241 = vpop.f32.mrf.mxu0
      %v242 = vadd.f32 %v228, %v241
      %243 = vdwg.mxu0
      %v244 = vunpack.c.l.bf16 %v72
      %v245 = vunpack.c.h.bf16 %v72
      %v246 = vunpack.c.l.bf16 %v73
      %v247 = vunpack.c.h.bf16 %v73
      %v248 = vadd.f32 %v244, %v245
      %249 = vadd.xlane.f32.xlu0 %v248
      %v250 = vpop.xlane.xlu0 %249
      %v251 = vadd.f32 %v246, %v247
      %252 = vadd.xlane.f32.xlu0 %v251
      %v253 = vpop.xlane.xlu0 %252
      %v254 = vadd.f32 %v250, 256.0
      %v255 = vadd.f32 %v253, 256.0
      %v256 = vmul.f32 %v254, 2.0
      %v257 = vmul.f32 %v255, 2.0
      %v258 = vld [vmem:[%s3] sm:$0x1]
      %v260 = vperm.slane %v258, 0
      %v262 = vadd.f32 %v260, %v256
      %v263 = vadd.f32 %v260, %v257
      %v264 = vrcp.pop %v262
      %v265 = vrcp.pop %v263
      %v266 = vmul.f32 %v260, %v264
      %v267 = vmul.f32 %v260, %v265
      %v268 = vmul.f32 %v266, %v240
      %v269 = vmul.f32 %v267, %v242
      %v270 = vpack.c.bf16 %v268, %v268
      %v271 = vpack.c.bf16 %v269, %v269
      %272 = vst [vmem:[#allocation2] sm:$0xf] %v270
      %273 = vst [vmem:[#allocation2 + $0x4] sm:$0xf] %v271
    $region37: #{tpu_custom_call.1} parent=1 // pred_fallthru
      _
    %v274 = vld [vmem:[#allocation2] sm:$0xf]
    %v275 = vld [vmem:[#allocation2 + $0x4] sm:$0xf]
    %v276 = vld [vmem:[#allocation8] sm:$0xff]
    %v277 = vld [vmem:[#allocation8 + $0x8] sm:$0xff]
    %v278 = vld [vmem:[#allocation8 + $0x10] sm:$0xff]
    %v279 = vld [vmem:[#allocation8 + $0x18] sm:$0xff]
    %v280 = vld [vmem:[#allocation8 + $0x20] sm:$0xff]
    %v281 = vld [vmem:[#allocation8 + $0x28] sm:$0xff]
    %v282 = vld [vmem:[#allocation8 + $0x30] sm:$0xff]
    %v283 = vld [vmem:[#allocation8 + $0x38] sm:$0xff]
    %v284 = vld [vmem:[#allocation8 + $0x40] sm:$0xff]
    %v285 = vld [vmem:[#allocation8 + $0x48] sm:$0xff]
    %v286 = vld [vmem:[#allocation8 + $0x50] sm:$0xff]
    %v287 = vld [vmem:[#allocation8 + $0x58] sm:$0xff]
    %v288 = vld [vmem:[#allocation8 + $0x60] sm:$0xff]
    %v289 = vld [vmem:[#allocation8 + $0x68] sm:$0xff]
    %v290 = vld [vmem:[#allocation8 + $0x70] sm:$0xff]
    %v291 = vld [vmem:[#allocation8 + $0x78] sm:$0xff]
    %v294 = vunpack.c.l.b16 %v274
    %v295 = vunpack.c.l.b16 %v275
    %v296 = vpack.c.b16 %v295, %v294
    %v314 = vunpack.c.l.b16 %v276
    %v315 = vunpack.c.h.b16 %v276
    %v316 = vunpack.c.l.b16 %v277
    %v317 = vunpack.c.h.b16 %v277
    %v318 = vunpack.c.l.b16 %v278
    %v319 = vunpack.c.h.b16 %v278
    %v320 = vunpack.c.l.b16 %v279
    %v321 = vunpack.c.h.b16 %v279
    %v322 = vunpack.c.l.b16 %v280
    %v323 = vunpack.c.h.b16 %v280
    %v324 = vunpack.c.l.b16 %v281
    %v325 = vunpack.c.h.b16 %v281
    %v326 = vunpack.c.l.b16 %v282
    %v327 = vunpack.c.h.b16 %v282
    %v328 = vunpack.c.l.b16 %v283
    %v329 = vunpack.c.h.b16 %v283
    %v330 = vunpack.c.l.b16 %v284
    %v331 = vunpack.c.h.b16 %v284
    %v332 = vunpack.c.l.b16 %v285
    %v333 = vunpack.c.h.b16 %v285
    %v334 = vunpack.c.l.b16 %v286
    %v335 = vunpack.c.h.b16 %v286
    %v336 = vunpack.c.l.b16 %v287
    %v337 = vunpack.c.h.b16 %v287
    %v338 = vunpack.c.l.b16 %v288
    %v339 = vunpack.c.h.b16 %v288
    %v340 = vunpack.c.l.b16 %v289
    %v341 = vunpack.c.h.b16 %v289
    %v342 = vunpack.c.l.b16 %v290
    %v343 = vunpack.c.h.b16 %v290
    %v344 = vunpack.c.l.b16 %v291
    %v345 = vunpack.c.h.b16 %v291
    %v346 = vpack.c.b16 %v316, %v314
    %v347 = vpack.c.b16 %v317, %v315
    %v348 = vpack.c.b16 %v320, %v318
    %v349 = vpack.c.b16 %v321, %v319
    %v350 = vpack.c.b16 %v324, %v322
    %v351 = vpack.c.b16 %v325, %v323
    %v352 = vpack.c.b16 %v328, %v326
    %v353 = vpack.c.b16 %v329, %v327
    %v354 = vpack.c.b16 %v332, %v330
    %v355 = vpack.c.b16 %v333, %v331
    %v356 = vpack.c.b16 %v336, %v334
    %v357 = vpack.c.b16 %v337, %v335
    %v358 = vpack.c.b16 %v340, %v338
    %v359 = vpack.c.b16 %v341, %v339
    %v360 = vpack.c.b16 %v344, %v342
    %v361 = vpack.c.b16 %v345, %v343
    %378 = vmatpush.bf16.msra.mxu0 %v360
    %379 = vmatpush.bf16.msra.mxu0 %v358
    %380 = vmatpush.bf16.msra.mxu0 %v356
    %381 = vmatpush.bf16.msra.mxu0 %v354
    %382 = vmatpush.bf16.msra.mxu0 %v352
    %383 = vmatpush.bf16.msra.mxu0 %v350
    %384 = vmatpush.bf16.msra.mxu0 %v348
    %385 = vmatpush.bf16.msra.mxu0 %v346
    %386 = vmatmul.bf16.gmra.mxu0 %v296
    %v387 = vpop.f32.mrf.mxu0
    %v388 = vadd.f32 0.0, %v387
    %v389 = vpop.f32.mrf.mxu0
    %v390 = vadd.f32 0.0, %v389
    %391 = vdwg.mxu0
    %392 = vmatpush.bf16.msra.mxu0 %v361
    %393 = vmatpush.bf16.msra.mxu0 %v359
    %394 = vmatpush.bf16.msra.mxu0 %v357
    %395 = vmatpush.bf16.msra.mxu0 %v355
    %396 = vmatpush.bf16.msra.mxu0 %v353
    %397 = vmatpush.bf16.msra.mxu0 %v351
    %398 = vmatpush.bf16.msra.mxu0 %v349
    %399 = vmatpush.bf16.msra.mxu0 %v347
    %400 = vmatmul.bf16.gmra.mxu0 %v296
    %v401 = vpop.f32.mrf.mxu0
    %v402 = vadd.f32 0.0, %v401
    %v403 = vpop.f32.mrf.mxu0
    %v404 = vadd.f32 0.0, %v403
    %405 = vdwg.mxu0
    %406 = vst [vmem:[#allocation9] sm:$0xff] %v388
    %407 = vst [vmem:[#allocation9 + $0x8] sm:$0xff] %v402
    %408 = vst [vmem:[#allocation9 + $0x10] sm:$0xff] %v390
    %409 = vst [vmem:[#allocation9 + $0x18] sm:$0xff] %v404
    // Predicated region
    $region38: #{tpu_custom_call.1} parent=1 // pred_check
      _
    $region39: #{tpu_custom_call.1} parent=1 // pred_check_branch
      %411 = sbr.rel (0) target = $region41
    $region40: #{tpu_custom_call.1} parent=1 // pred_region
      %413 = vsyncadd [#allocation5], 0
      %s414 = sshll.u32 [#allocation9], 4
      %s415 = int_to_ptr.vmem [resolvable:$true] %s414
      %s416 = sshll.u32 %s5, 4
      %s417 = int_to_ptr.hbm [resolvable:$true] %s416
      %422 = dma.vmem_to_hbm [thread:$0]  %s415, 512, %s417, [#allocation5], 256, 256, 16
    $region41: #{tpu_custom_call.1} parent=1 // pred_fallthru
      _
    // Predicated region
    $region42: #{tpu_custom_call.1} parent=1 // pred_check
      _
    $region43: #{tpu_custom_call.1} parent=1 // pred_check_branch
      %424 = sbr.rel (0) target = $region45
    $region44: #{tpu_custom_call.1} parent=1 // pred_region
      %426 = dma.done [#allocation5], 512
    $region45: #{tpu_custom_call.1} parent=1 // pred_fallthru
      _
    %427 = vsyncpa [#allocation4], 1
    %428 = vsyncpa [#allocation7], 1
    %429 = vsyncpa [#allocation5], 1

// kernel: tpu_custom_call.1
$region0: #{tpu_custom_call.1}
  #allocation0 [shape = 'u32[]', space=smem, size = 0x4, offset = 0x4, fixed_abs, tag = 'smem constant byte address 0x4 - core index']
  #allocation1 [shape = 'u32[72,128]{1,0:T(1,128)}', space=vmem, size = 0x9000, scoped, tag = 'internal scratch']
  #allocation2 [shape = 'bf16[16,128]{1,0:T(8,128)(2,1)}', space=vmem, size = 0x1000, scoped, tag = 'scratch operand']
  %s0 = inlined_call_operand.hbm [shape: bf16[16,256], index: 0, kind: input, shape index: {}]
  %s1 = inlined_call_operand.hbm [shape: bf16[256,128], index: 1, kind: input, shape index: {}]
  %s2 = inlined_call_operand.vmem [shape: f32[1,128], index: 2, kind: input, shape index: {}]
  %s3 = inlined_call_operand.vmem [shape: f32[1,128], index: 3, kind: input, shape index: {}]
  %s4 = inlined_call_operand.hbm [shape: bf16[128,256], index: 4, kind: input, shape index: {}]
  %s5 = inlined_call_operand.hbm [shape: f32[16,256], index: 5, kind: output, shape index: {}]
  %s6 = sld [smem:[#allocation0]]
  $region46: #{tpu_custom_call.1} parent=0
    _
  %s8 = ssub.s32 1, %s6
  %s9 = scalar_select 0, %s8, %s6
  $region1: #{tpu_custom_call.1} parent=0
    #allocation3 [shape = 'u8[8192]{0}', space=vmem, size = 0x2000, scoped, tag = 'input window, operand 0, single buffered']
    #allocation4 [shape = 's32[1]{0}', space=sflag, size = 0x4, scoped, tag = 'scoped memory for tpu_custom_call.1']
    #allocation5 [shape = 's32[1]{0}', space=sflag, size = 0x4, scoped, tag = 'scoped memory for tpu_custom_call.1']
    #allocation6 [shape = 'u8[65536]{0}', space=vmem, size = 0x10000, scoped, tag = 'input window, operand 1, single buffered']
    #allocation7 [shape = 's32[1]{0}', space=sflag, size = 0x4, scoped, tag = 'scoped memory for tpu_custom_call.1']
    #allocation8 [shape = 'u8[65536]{0}', space=vmem, size = 0x10000, scoped, tag = 'input window, operand 4, single buffered']
    #allocation9 [shape = 'u8[16384]{0}', space=vmem, size = 0x4000, scoped, tag = 'output window, operand 0, single buffered']
    %10 = vsyncpa [#allocation4], 0
    %11 = vsyncpa [#allocation7], 0
    %12 = vsyncpa [#allocation5], 0
    // Predicated region
    $region2: #{tpu_custom_call.1} parent=1 // pred_check
      _
    $region3: #{tpu_custom_call.1} parent=1 // pred_check_branch
      %14 = sbr.rel (0) target = $region5
    $region4: #{tpu_custom_call.1} parent=1 // pred_region
      %16 = vsyncadd [#allocation4], 0
      %s17 = sshll.u32 %s0, 4
      %s18 = int_to_ptr.hbm [resolvable:$true] %s17
      %s19 = sshll.u32 [#allocation3], 4
      %s20 = int_to_ptr.vmem [resolvable:$true] %s19
      %25 = dma.hbm_to_vmem [thread:$0]  %s18, 256, %s20, [#allocation4], 128, 128, 8
    $region5: #{tpu_custom_call.1} parent=1 // pred_fallthru
      _
    // Predicated region
    $region6: #{tpu_custom_call.1} parent=1 // pred_check
      _
    $region7: #{tpu_custom_call.1} parent=1 // pred_check_branch
      %27 = sbr.rel (0) target = $region9
    $region8: #{tpu_custom_call.1} parent=1 // pred_region
      %29 = vsyncadd [#allocation7], 0
      %s30 = sshll.u32 %s1, 4
      %s31 = int_to_ptr.hbm [resolvable:$true] %s30
      %s32 = sshll.u32 [#allocation6], 4
      %s33 = int_to_ptr.vmem [resolvable:$true] %s32
      %38 = dma.hbm_to_vmem [thread:$0]  %s31, 2048, %s33, [#allocation7], 64, 64, 4
    $region9: #{tpu_custom_call.1} parent=1 // pred_fallthru
      _
    // Predicated region
    $region10: #{tpu_custom_call.1} parent=1 // pred_check
      _
    $region11: #{tpu_custom_call.1} parent=1 // pred_check_branch
      %40 = sbr.rel (0) target = $region13
    $region12: #{tpu_custom_call.1} parent=1 // pred_region
      _
    $region13: #{tpu_custom_call.1} parent=1 // pred_fallthru
      _
    // Predicated region
    $region14: #{tpu_custom_call.1} parent=1 // pred_check
      _
    $region15: #{tpu_custom_call.1} parent=1 // pred_check_branch
      %42 = sbr.rel (0) target = $region17
    $region16: #{tpu_custom_call.1} parent=1 // pred_region
      _
    $region17: #{tpu_custom_call.1} parent=1 // pred_fallthru
      _
    // Predicated region
    $region18: #{tpu_custom_call.1} parent=1 // pred_check
      _
    $region19: #{tpu_custom_call.1} parent=1 // pred_check_branch
      %44 = sbr.rel (0) target = $region21
    $region20: #{tpu_custom_call.1} parent=1 // pred_region
      %46 = vsyncadd [#allocation7], 0
      %s47 = sshll.u32 %s4, 4
      %s48 = int_to_ptr.hbm [resolvable:$true] %s47
      %s49 = sshll.u32 [#allocation8], 4
      %s50 = int_to_ptr.vmem [resolvable:$true] %s49
      %55 = dma.hbm_to_vmem [thread:$0]  %s48, 2048, %s50, [#allocation7], 128, 128, 8
    $region21: #{tpu_custom_call.1} parent=1 // pred_fallthru
      _
    // Predicated region
    $region22: #{tpu_custom_call.1} parent=1 // pred_check
      _
    $region23: #{tpu_custom_call.1} parent=1 // pred_check_branch
      %57 = sbr.rel (0) target = $region25
    $region24: #{tpu_custom_call.1} parent=1 // pred_region
      %59 = dma.done [#allocation4], 256
    $region25: #{tpu_custom_call.1} parent=1 // pred_fallthru
      _
    // Predicated region
    $region26: #{tpu_custom_call.1} parent=1 // pred_check
      _
    $region27: #{tpu_custom_call.1} parent=1 // pred_check_branch
      %61 = sbr.rel (0) target = $region29
    $region28: #{tpu_custom_call.1} parent=1 // pred_region
      %63 = dma.done [#allocation7], 2048
    $region29: #{tpu_custom_call.1} parent=1 // pred_fallthru
      _
    // Predicated region
    $region30: #{tpu_custom_call.1} parent=1 // pred_check
      _
    $region31: #{tpu_custom_call.1} parent=1 // pred_check_branch
      %65 = sbr.rel (0) target = $region33
    $region32: #{tpu_custom_call.1} parent=1 // pred_region
      %67 = dma.done [#allocation7], 2048
    $region33: #{tpu_custom_call.1} parent=1 // pred_fallthru
      _
    %p68 = scmp.eq.s32.totalorder 0, 0
    // Predicated region
    $region34: #{tpu_custom_call.1} parent=1 // pred_check
      %p69 = pneg %p68
    $region35: #{tpu_custom_call.1} parent=1 // pred_check_branch
      %71 = sbr.rel (%p69) target = $region37
    $region36: #{tpu_custom_call.1} parent=1 // pred_region
      %v72 = vld [vmem:[#allocation3] sm:$0xff]
      %v73 = vld [vmem:[#allocation3 + $0x8] sm:$0xff]
      %v74 = vld [vmem:[#allocation6] sm:$0xf]
      %v75 = vld [vmem:[#allocation6 + $0x4] sm:$0xf]
      %v76 = vld [vmem:[#allocation6 + $0x8] sm:$0xf]
      %v77 = vld [vmem:[#allocation6 + $0xc] sm:$0xf]
      %v78 = vld [vmem:[#allocation6 + $0x10] sm:$0xf]
      %v79 = vld [vmem:[#allocation6 + $0x14] sm:$0xf]
      %v80 = vld [vmem:[#allocation6 + $0x18] sm:$0xf]
      %v81 = vld [vmem:[#allocation6 + $0x1c] sm:$0xf]
      %v82 = vld [vmem:[#allocation6 + $0x20] sm:$0xf]
      %v83 = vld [vmem:[#allocation6 + $0x24] sm:$0xf]
      %v84 = vld [vmem:[#allocation6 + $0x28] sm:$0xf]
      %v85 = vld [vmem:[#allocation6 + $0x2c] sm:$0xf]
      %v86 = vld [vmem:[#allocation6 + $0x30] sm:$0xf]
      %v87 = vld [vmem:[#allocation6 + $0x34] sm:$0xf]
      %v88 = vld [vmem:[#allocation6 + $0x38] sm:$0xf]
      %v89 = vld [vmem:[#allocation6 + $0x3c] sm:$0xf]
      %v90 = vld [vmem:[#allocation6 + $0x40] sm:$0xf]
      %v91 = vld [vmem:[#allocation6 + $0x44] sm:$0xf]
      %v92 = vld [vmem:[#allocation6 + $0x48] sm:$0xf]
      %v93 = vld [vmem:[#allocation6 + $0x4c] sm:$0xf]
      %v94 = vld [vmem:[#allocation6 + $0x50] sm:$0xf]
      %v95 = vld [vmem:[#allocation6 + $0x54] sm:$0xf]
      %v96 = vld [vmem:[#allocation6 + $0x58] sm:$0xf]
      %v97 = vld [vmem:[#allocation6 + $0x5c] sm:$0xf]
      %v98 = vld [vmem:[#allocation6 + $0x60] sm:$0xf]
      %v99 = vld [vmem:[#allocation6 + $0x64] sm:$0xf]
      %v100 = vld [vmem:[#allocation6 + $0x68] sm:$0xf]
      %v101 = vld [vmem:[#allocation6 + $0x6c] sm:$0xf]
      %v102 = vld [vmem:[#allocation6 + $0x70] sm:$0xf]
      %v103 = vld [vmem:[#allocation6 + $0x74] sm:$0xf]
      %v104 = vld [vmem:[#allocation6 + $0x78] sm:$0xf]
      %v105 = vld [vmem:[#allocation6 + $0x7c] sm:$0xf]
      %v106 = vld [vmem:[%s2] sm:$0x1]
      %v108 = vperm.slane %v106, 0
      %v112 = vunpack.c.l.b16 %v72
      %v113 = vunpack.c.h.b16 %v72
      %v114 = vunpack.c.l.b16 %v73
      %v115 = vunpack.c.h.b16 %v73
      %v116 = vpack.c.b16 %v114, %v112
      %v117 = vpack.c.b16 %v115, %v113
      %v152 = vunpack.c.l.b16 %v74
      %v153 = vunpack.c.l.b16 %v75
      %v154 = vunpack.c.l.b16 %v76
      %v155 = vunpack.c.l.b16 %v77
      %v156 = vunpack.c.l.b16 %v78
      %v157 = vunpack.c.l.b16 %v79
      %v158 = vunpack.c.l.b16 %v80
      %v159 = vunpack.c.l.b16 %v81
      %v160 = vunpack.c.l.b16 %v82
      %v161 = vunpack.c.l.b16 %v83
      %v162 = vunpack.c.l.b16 %v84
      %v163 = vunpack.c.l.b16 %v85
      %v164 = vunpack.c.l.b16 %v86
      %v165 = vunpack.c.l.b16 %v87
      %v166 = vunpack.c.l.b16 %v88
      %v167 = vunpack.c.l.b16 %v89
      %v168 = vunpack.c.l.b16 %v90
      %v169 = vunpack.c.l.b16 %v91
      %v170 = vunpack.c.l.b16 %v92
      %v171 = vunpack.c.l.b16 %v93
      %v172 = vunpack.c.l.b16 %v94
      %v173 = vunpack.c.l.b16 %v95
      %v174 = vunpack.c.l.b16 %v96
      %v175 = vunpack.c.l.b16 %v97
      %v176 = vunpack.c.l.b16 %v98
      %v177 = vunpack.c.l.b16 %v99
      %v178 = vunpack.c.l.b16 %v100
      %v179 = vunpack.c.l.b16 %v101
      %v180 = vunpack.c.l.b16 %v102
      %v181 = vunpack.c.l.b16 %v103
      %v182 = vunpack.c.l.b16 %v104
      %v183 = vunpack.c.l.b16 %v105
      %v184 = vpack.c.b16 %v153, %v152
      %v185 = vpack.c.b16 %v155, %v154
      %v186 = vpack.c.b16 %v157, %v156
      %v187 = vpack.c.b16 %v159, %v158
      %v188 = vpack.c.b16 %v161, %v160
      %v189 = vpack.c.b16 %v163, %v162
      %v190 = vpack.c.b16 %v165, %v164
      %v191 = vpack.c.b16 %v167, %v166
      %v192 = vpack.c.b16 %v169, %v168
      %v193 = vpack.c.b16 %v171, %v170
      %v194 = vpack.c.b16 %v173, %v172
      %v195 = vpack.c.b16 %v175, %v174
      %v196 = vpack.c.b16 %v177, %v176
      %v197 = vpack.c.b16 %v179, %v178
      %v198 = vpack.c.b16 %v181, %v180
      %v199 = vpack.c.b16 %v183, %v182
      %216 = vmatpush.bf16.msra.mxu0 %v191
      %217 = vmatpush.bf16.msra.mxu0 %v190
      %218 = vmatpush.bf16.msra.mxu0 %v189
      %219 = vmatpush.bf16.msra.mxu0 %v188
      %220 = vmatpush.bf16.msra.mxu0 %v187
      %221 = vmatpush.bf16.msra.mxu0 %v186
      %222 = vmatpush.bf16.msra.mxu0 %v185
      %223 = vmatpush.bf16.msra.mxu0 %v184
      %224 = vmatmul.bf16.gmra.mxu0 %v116
      %v225 = vpop.f32.mrf.mxu0
      %v226 = vadd.f32 %v108, %v225
      %v227 = vpop.f32.mrf.mxu0
      %v228 = vadd.f32 %v108, %v227
      %229 = vdwg.mxu0
      %230 = vmatpush.bf16.msra.mxu0 %v199
      %231 = vmatpush.bf16.msra.mxu0 %v198
      %232 = vmatpush.bf16.msra.mxu0 %v197
      %233 = vmatpush.bf16.msra.mxu0 %v196
      %234 = vmatpush.bf16.msra.mxu0 %v195
      %235 = vmatpush.bf16.msra.mxu0 %v194
      %236 = vmatpush.bf16.msra.mxu0 %v193
      %237 = vmatpush.bf16.msra.mxu0 %v192
      %238 = vmatmul.bf16.gmra.mxu0 %v117
      %v239 = vpop.f32.mrf.mxu0
      %v240 = vadd.f32 %v226, %v239
      %v241 = vpop.f32.mrf.mxu0
      %v242 = vadd.f32 %v228, %v241
      %243 = vdwg.mxu0
      %v244 = vunpack.c.l.bf16 %v72
      %v245 = vunpack.c.h.bf16 %v72
      %v246 = vunpack.c.l.bf16 %v73
      %v247 = vunpack.c.h.bf16 %v73
      %v248 = vadd.f32 %v244, %v245
      %249 = vadd.xlane.f32.xlu0 %v248
      %v250 = vpop.xlane.xlu0 %249
      %v251 = vadd.f32 %v246, %v247
      %252 = vadd.xlane.f32.xlu0 %v251
      %v253 = vpop.xlane.xlu0 %252
      %v254 = vadd.f32 %v250, 256.0
      %v255 = vadd.f32 %v253, 256.0
      %v256 = vmul.f32 %v254, 2.0
      %v257 = vmul.f32 %v255, 2.0
      %v258 = vld [vmem:[%s3] sm:$0x1]
      %v260 = vperm.slane %v258, 0
      %v262 = vadd.f32 %v260, %v256
      %v263 = vadd.f32 %v260, %v257
      %v264 = vrcp.pop %v262
      %v265 = vrcp.pop %v263
      %v266 = vmul.f32 %v260, %v264
      %v267 = vmul.f32 %v260, %v265
      %v268 = vmul.f32 %v266, %v240
      %v269 = vmul.f32 %v267, %v242
      %v270 = vpack.c.bf16 %v268, %v268
      %v271 = vpack.c.bf16 %v269, %v269
      %272 = vst [vmem:[#allocation2] sm:$0xf] %v270
      %273 = vst [vmem:[#allocation2 + $0x4] sm:$0xf] %v271
    $region37: #{tpu_custom_call.1} parent=1 // pred_fallthru
      _
    %v274 = vld [vmem:[#allocation2] sm:$0xf]
    %v275 = vld [vmem:[#allocation2 + $0x4] sm:$0xf]
    %v276 = vld [vmem:[#allocation8] sm:$0xff]
    %v277 = vld [vmem:[#allocation8 + $0x8] sm:$0xff]
    %v278 = vld [vmem:[#allocation8 + $0x10] sm:$0xff]
    %v279 = vld [vmem:[#allocation8 + $0x18] sm:$0xff]
    %v280 = vld [vmem:[#allocation8 + $0x20] sm:$0xff]
    %v281 = vld [vmem:[#allocation8 + $0x28] sm:$0xff]
    %v282 = vld [vmem:[#allocation8 + $0x30] sm:$0xff]
    %v283 = vld [vmem:[#allocation8 + $0x38] sm:$0xff]
    %v284 = vld [vmem:[#allocation8 + $0x40] sm:$0xff]
    %v285 = vld [vmem:[#allocation8 + $0x48] sm:$0xff]
    %v286 = vld [vmem:[#allocation8 + $0x50] sm:$0xff]
    %v287 = vld [vmem:[#allocation8 + $0x58] sm:$0xff]
    %v288 = vld [vmem:[#allocation8 + $0x60] sm:$0xff]
    %v289 = vld [vmem:[#allocation8 + $0x68] sm:$0xff]
    %v290 = vld [vmem:[#allocation8 + $0x70] sm:$0xff]
    %v291 = vld [vmem:[#allocation8 + $0x78] sm:$0xff]
    %v294 = vunpack.c.l.b16 %v274
    %v295 = vunpack.c.l.b16 %v275
    %v296 = vpack.c.b16 %v295, %v294
    %v314 = vunpack.c.l.b16 %v276
    %v315 = vunpack.c.h.b16 %v276
    %v316 = vunpack.c.l.b16 %v277
    %v317 = vunpack.c.h.b16 %v277
    %v318 = vunpack.c.l.b16 %v278
    %v319 = vunpack.c.h.b16 %v278
    %v320 = vunpack.c.l.b16 %v279
    %v321 = vunpack.c.h.b16 %v279
    %v322 = vunpack.c.l.b16 %v280
    %v323 = vunpack.c.h.b16 %v280
    %v324 = vunpack.c.l.b16 %v281
    %v325 = vunpack.c.h.b16 %v281
    %v326 = vunpack.c.l.b16 %v282
    %v327 = vunpack.c.h.b16 %v282
    %v328 = vunpack.c.l.b16 %v283
    %v329 = vunpack.c.h.b16 %v283
    %v330 = vunpack.c.l.b16 %v284
    %v331 = vunpack.c.h.b16 %v284
    %v332 = vunpack.c.l.b16 %v285
    %v333 = vunpack.c.h.b16 %v285
    %v334 = vunpack.c.l.b16 %v286
    %v335 = vunpack.c.h.b16 %v286
    %v336 = vunpack.c.l.b16 %v287
    %v337 = vunpack.c.h.b16 %v287
    %v338 = vunpack.c.l.b16 %v288
    %v339 = vunpack.c.h.b16 %v288
    %v340 = vunpack.c.l.b16 %v289
    %v341 = vunpack.c.h.b16 %v289
    %v342 = vunpack.c.l.b16 %v290
    %v343 = vunpack.c.h.b16 %v290
    %v344 = vunpack.c.l.b16 %v291
    %v345 = vunpack.c.h.b16 %v291
    %v346 = vpack.c.b16 %v316, %v314
    %v347 = vpack.c.b16 %v317, %v315
    %v348 = vpack.c.b16 %v320, %v318
    %v349 = vpack.c.b16 %v321, %v319
    %v350 = vpack.c.b16 %v324, %v322
    %v351 = vpack.c.b16 %v325, %v323
    %v352 = vpack.c.b16 %v328, %v326
    %v353 = vpack.c.b16 %v329, %v327
    %v354 = vpack.c.b16 %v332, %v330
    %v355 = vpack.c.b16 %v333, %v331
    %v356 = vpack.c.b16 %v336, %v334
    %v357 = vpack.c.b16 %v337, %v335
    %v358 = vpack.c.b16 %v340, %v338
    %v359 = vpack.c.b16 %v341, %v339
    %v360 = vpack.c.b16 %v344, %v342
    %v361 = vpack.c.b16 %v345, %v343
    %378 = vmatpush.bf16.msra.mxu0 %v360
    %379 = vmatpush.bf16.msra.mxu0 %v358
    %380 = vmatpush.bf16.msra.mxu0 %v356
    %381 = vmatpush.bf16.msra.mxu0 %v354
    %382 = vmatpush.bf16.msra.mxu0 %v352
    %383 = vmatpush.bf16.msra.mxu0 %v350
    %384 = vmatpush.bf16.msra.mxu0 %v348
    %385 = vmatpush.bf16.msra.mxu0 %v346
    %386 = vmatmul.bf16.gmra.mxu0 %v296
    %v387 = vpop.f32.mrf.mxu0
    %v388 = vadd.f32 0.0, %v387
    %v389 = vpop.f32.mrf.mxu0
    %v390 = vadd.f32 0.0, %v389
    %391 = vdwg.mxu0
    %392 = vmatpush.bf16.msra.mxu0 %v361
    %393 = vmatpush.bf16.msra.mxu0 %v359
    %394 = vmatpush.bf16.msra.mxu0 %v357
    %395 = vmatpush.bf16.msra.mxu0 %v355
    %396 = vmatpush.bf16.msra.mxu0 %v353
    %397 = vmatpush.bf16.msra.mxu0 %v351
    %398 = vmatpush.bf16.msra.mxu0 %v349
    %399 = vmatpush.bf16.msra.mxu0 %v347
    %400 = vmatmul.bf16.gmra.mxu0 %v296
    %v401 = vpop.f32.mrf.mxu0
    %v402 = vadd.f32 0.0, %v401
    %v403 = vpop.f32.mrf.mxu0
    %v404 = vadd.f32 0.0, %v403
    %405 = vdwg.mxu0
    %406 = vst [vmem:[#allocation9] sm:$0xff] %v388
    %407 = vst [vmem:[#allocation9 + $0x8] sm:$0xff] %v402
    %408 = vst [vmem:[#allocation9 + $0x10] sm:$0xff] %v390
    %409 = vst [vmem:[#allocation9 + $0x18] sm:$0xff] %v404
    // Predicated region
    $region38: #{tpu_custom_call.1} parent=1 // pred_check
      _
    $region39: #{tpu_custom_call.1} parent=1 // pred_check_branch
      %411 = sbr.rel (0) target = $region41
    $region40: #{tpu_custom_call.1} parent=1 // pred_region
      %413 = vsyncadd [#allocation5], 0
      %s414 = sshll.u32 [#allocation9], 4
      %s415 = int_to_ptr.vmem [resolvable:$true] %s414
      %s416 = sshll.u32 %s5, 4
      %s417 = int_to_ptr.hbm [resolvable:$true] %s416
      %422 = dma.vmem_to_hbm [thread:$0]  %s415, 512, %s417, [#allocation5], 256, 256, 16
    $region41: #{tpu_custom_call.1} parent=1 // pred_fallthru
      _
    // Predicated region
    $region42: #{tpu_custom_call.1} parent=1 // pred_check
      _
    $region43: #{tpu_custom_call.1} parent=1 // pred_check_branch
      %424 = sbr.rel (0) target = $region45
    $region44: #{tpu_custom_call.1} parent=1 // pred_region
      %426 = dma.done [#allocation5], 512
    $region45: #{tpu_custom_call.1} parent=1 // pred_fallthru
      _
    %427 = vsyncpa [#allocation4], 1
    %428 = vsyncpa [#allocation7], 1
    %429 = vsyncpa [#allocation5], 1

</llo_original>
